<compile_context>
chip_gen: v7x
topology: tpu7x:2x2x1
jax: 0.10.0
libtpu: 0.0.40
codegen_flags: <defaults>
</compile_context>

<pallas_src>
import jax
import jax.numpy as jnp
from jax import lax
from jax.experimental import pallas as pl
from jax.experimental.pallas import tpu as pltpu

# ----------------------------- configuration -----------------------------
N, CIN, H, W = 2, 4, 16, 16      # input (NCHW)
CF = 8                           # channels produced by each feature branch
NBRANCH = 2                      # number of feature models in model_list
CCAT = NBRANCH * CF              # channels after torch.cat(dim=1)       (16)
COUT = 3                         # prediction model output channels
COUT_PAD = 8                     # padded to a full sublane tile
HW = H * W                       # pixels per batch element              (256)
NPIX = N * HW                    # total pixels = lane dimension         (512)
KTAPS = 9 * CIN                  # im2col feature length                  (36)
KP = KTAPS + 1                   # + all-ones row that carries the bias   (37)
PROWS = CCAT + COUT_PAD          # rows of the packed parameter slab      (24)


# ------------------------------- kernel ----------------------------------
def multi_unet_kernel(p_ref, prm_ref, o_ref):
    """Whole (tiny) problem resident in VMEM, single invocation.

    p_ref   : (KP, NPIX)          im2col patches + ones row, pixels on lanes
    prm_ref : (PROWS, KP)         packed params:
                                    rows 0..15              -> fused 3x3 weight
                                                               (bias in col 36)
                                    rows 16..23, cols 0..15 -> padded 1x1 weight
                                    rows 16..23, col  16    -> padded 1x1 bias
    o_ref   : (N, COUT_PAD, HW)   output (NCHW order, channels zero-padded)
    """
    wf = prm_ref[:CCAT, :]                        # (16, 37)
    wp = prm_ref[CCAT:, :CCAT]                    # (8, 16)
    bp = prm_ref[CCAT:, CCAT:CCAT + 1]            # (8, 1)

    # Both feature branches + bias + channel concat in ONE MXU matmul:
    #   (16, 37) @ (37, 512) -> (16, 512); rows 0..7 branch 1, 8..15 branch 2.
    feat = jnp.maximum(
        jnp.dot(wf, p_ref[...], preferred_element_type=jnp.float32), 0.0)

    # Prediction model (1x1 conv): (8, 16) @ (16, 512) -> (8, 512).
    pred = jnp.dot(wp, feat, preferred_element_type=jnp.float32) + bp

    # Lane-dense, full-sublane stores: each batch element is an aligned
    # (8, 256) slab whose lane offset is a multiple of 128.
    for n in range(N):
        o_ref[n, :, :] = pred[:, n * HW:(n + 1) * HW].astype(o_ref.dtype)


# --------------------- parameter fusion (model init) ----------------------
def fuse_params(params):
    """Precompute the single packed (PROWS, KP) parameter slab ONCE."""
    w1, b1, w2, b2, wp, bp = params
    # fused 3x3 weights of both branches, transposed: (16, 36)
    wf = jnp.concatenate(
        [w1.reshape(KTAPS, CF), w2.reshape(KTAPS, CF)], axis=1).T
    bf = jnp.concatenate([b1, b2]).reshape(CCAT, 1)        # (16, 1)
    top = jnp.concatenate([wf, bf], axis=1)                # (16, 37) bias col 36

    bottom = jnp.zeros((COUT_PAD, KP), jnp.float32)
    bottom = bottom.at[:COUT, :CCAT].set(wp.T)             # 1x1 weight (padded)
    bottom = bottom.at[:COUT, CCAT].set(bp)                # 1x1 bias   (padded)

    return jnp.concatenate([top, bottom], axis=0)          # (24, 37)


# ------------------------------- forward ----------------------------------
def _forward_impl(x_nchw, fused_prm):
    """x_nchw: (N, CIN, H, W) f32, fused_prm: (PROWS, KP) f32 -> (N, COUT, H, W)."""
    # layout glue (fused under jit): NCHW -> NHWC, pad, im2col, + ones row
    x_nhwc = jnp.transpose(x_nchw, (0, 2, 3, 1))                  # (N, H, W, CIN)
    x_pad = jnp.pad(x_nhwc, ((0, 0), (1, 1), (1, 1), (0, 0)))     # (N, H+2, W+2, CIN)
    taps = [x_pad[:, ky:ky + H, kx:kx + W, :]                     # 9 x (N, H, W, CIN)
            for ky in range(3) for kx in range(3)]
    patches = jnp.stack(taps, axis=3).reshape(NPIX, KTAPS).T      # (36, 512)
    patches = jnp.concatenate(
        [patches, jnp.ones((1, NPIX), patches.dtype)], axis=0)    # (37, 512)

    out = pl.pallas_call(
        multi_unet_kernel,
        out_shape=jax.ShapeDtypeStruct((N, COUT_PAD, HW), jnp.float32),
        in_specs=[
            pl.BlockSpec((KP, NPIX), lambda: (0, 0)),
            pl.BlockSpec((PROWS, KP), lambda: (0, 0)),
        ],
        out_specs=pl.BlockSpec((N, COUT_PAD, HW), lambda: (0, 0, 0)),
        cost_estimate=pl.CostEstimate(
            flops=2 * (CCAT * KP * NPIX + COUT_PAD * CCAT * NPIX),
            transcendentals=0,
            bytes_accessed=4 * (KP * NPIX + PROWS * KP + N * COUT_PAD * HW)),
    )(patches, fused_prm)

    # (N, COUT_PAD, HW) is already NCHW order -> slice padding, free reshape.
    return out[:, :COUT, :].reshape(N, COUT, H, W)


multi_unet_forward = jax.jit(_forward_impl)


# ----------------------- plain-JAX reference (check) ----------------------
def reference_forward(x_nchw, params):
    w1, b1, w2, b2, wp, bp = params

    def conv3x3(x, w, b):  # NCHW conv, weight (3,3,Cin,Cf) in HWIO
        y = lax.conv_general_dilated(
            x, w, window_strides=(1, 1), padding="SAME",
            dimension_numbers=("NCHW", "HWIO", "NCHW"))
        return jnp.maximum(y + b[None, :, None, None], 0.0)

    f1 = conv3x3(x_nchw, w1, b1)
    f2 = conv3x3(x_nchw, w2, b2)
    feat = jnp.concatenate([f1, f2], axis=1)                      # cat dim=1
    pred = jnp.einsum("nchw,cd->ndhw", feat, wp) + bp[None, :, None, None]
    return pred


# --------------------------------- main -----------------------------------
if __name__ == "__main__":
    key = jax.random.PRNGKey(0)
    k = jax.random.split(key, 8)

    x = jax.random.normal(k[0], (N, CIN, H, W), dtype=jnp.float32)

    # deterministic synthetic parameters (shapes implied by the module)
    w1 = jax.random.normal(k[1], (3, 3, CIN, CF), jnp.float32) * 0.1
    b1 = jax.random.normal(k[2], (CF,), jnp.float32) * 0.1
    w2 = jax.random.normal(k[3], (3, 3, CIN, CF), jnp.float32) * 0.1
    b2 = jax.random.normal(k[4], (CF,), jnp.float32) * 0.1
    wp = jax.random.normal(k[5], (CCAT, COUT), jnp.float32) * 0.1
    bp = jax.random.normal(k[6], (COUT,), jnp.float32) * 0.1
    params = (w1, b1, w2, b2, wp, bp)

    # parameter fusion happens ONCE at "model init", not per forward call
    fused_prm = jax.block_until_ready(fuse_params(params))

    out = jax.block_until_ready(multi_unet_forward(x, fused_prm))
    ref = jax.block_until_ready(reference_forward(x, params))

    assert out.shape == (N, COUT, H, W), out.shape
    assert jnp.allclose(out, ref, atol=1e-4, rtol=1e-4), \
        float(jnp.max(jnp.abs(out - ref)))

    print("KERNEL_OK")
</pallas_src>

<mosaic_0001>
module attributes {stable_mosaic.version = 11 : i64} {
  func.func @multi_unet_kernel(%arg0: memref<37x512xf32, #tpu.memory_space<vmem>>, %arg1: memref<24x37xf32, #tpu.memory_space<vmem>>, %arg2: memref<2x8x256xf32, #tpu.memory_space<vmem>>) attributes {dimension_semantics = [], scalar_prefetch = 0 : i64, scratch_operands = 0 : i64, tpu.core_type = #tpu.core_type<tc>} {
    %c0 = arith.constant 0 : index
    %c0_0 = arith.constant 0 : index
    %0 = vector.load %arg1[%c0, %c0_0] : memref<24x37xf32, #tpu.memory_space<vmem>>, vector<16x37xf32>
    %c16 = arith.constant 16 : index
    %c0_1 = arith.constant 0 : index
    %1 = vector.load %arg1[%c16, %c0_1] : memref<24x37xf32, #tpu.memory_space<vmem>>, vector<8x16xf32>
    %c16_2 = arith.constant 16 : index
    %c16_3 = arith.constant 16 : index
    %2 = vector.load %arg1[%c16_2, %c16_3] : memref<24x37xf32, #tpu.memory_space<vmem>>, vector<8x1xf32>
    %c0_4 = arith.constant 0 : index
    %c0_5 = arith.constant 0 : index
    %3 = vector.load %arg0[%c0_4, %c0_5] : memref<37x512xf32, #tpu.memory_space<vmem>>, vector<37x512xf32>
    %cst = arith.constant dense<0.000000e+00> : vector<16x512xf32>
    %4 = tpu.matmul %0, %3, %cst {dimension_numbers = #tpu.dot_dimension_numbers<[1], [0], [0], [1], [0, 0, 1, 1], [], []>} : vector<16x37xf32>, vector<37x512xf32>, vector<16x512xf32> -> vector<16x512xf32>
    %cst_6 = arith.constant 0.000000e+00 : f32
    %5 = vector.broadcast %cst_6 : f32 to vector<16x512xf32>
    %6 = arith.maximumf %4, %5 : vector<16x512xf32>
    %cst_7 = arith.constant dense<0.000000e+00> : vector<8x512xf32>
    %7 = tpu.matmul %1, %6, %cst_7 {dimension_numbers = #tpu.dot_dimension_numbers<[1], [0], [0], [1], [0, 0, 1, 1], [], []>} : vector<8x16xf32>, vector<16x512xf32>, vector<8x512xf32> -> vector<8x512xf32>
    %8 = vector.broadcast %2 : vector<8x1xf32> to vector<8x512xf32>
    %9 = arith.addf %7, %8 : vector<8x512xf32>
    %10 = vector.extract_strided_slice %9 {offsets = [0, 0], sizes = [8, 256], strides = [1, 1]} : vector<8x512xf32> to vector<8x256xf32>
    %c0_8 = arith.constant 0 : index
    %c0_9 = arith.constant 0 : index
    %c0_10 = arith.constant 0 : index
    %11 = vector.load %arg2[%c0_8, %c0_9, %c0_10] : memref<2x8x256xf32, #tpu.memory_space<vmem>>, vector<1x8x256xf32>
    %12 = vector.shape_cast %11 : vector<1x8x256xf32> to vector<8x256xf32>
    %13 = vector.shape_cast %10 : vector<8x256xf32> to vector<1x8x256xf32>
    tpu.vector_store %arg2[%c0_8, %c0_9, %c0_10], %13 {strides = array<i32>} : memref<2x8x256xf32, #tpu.memory_space<vmem>>, vector<1x8x256xf32>,
    %14 = vector.extract_strided_slice %9 {offsets = [0, 256], sizes = [8, 256], strides = [1, 1]} : vector<8x512xf32> to vector<8x256xf32>
    %c1 = arith.constant 1 : index
    %c0_11 = arith.constant 0 : index
    %c0_12 = arith.constant 0 : index
    %15 = vector.load %arg2[%c1, %c0_11, %c0_12] : memref<2x8x256xf32, #tpu.memory_space<vmem>>, vector<1x8x256xf32>
    %16 = vector.shape_cast %15 : vector<1x8x256xf32> to vector<8x256xf32>
    %17 = vector.shape_cast %14 : vector<8x256xf32> to vector<1x8x256xf32>
    tpu.vector_store %arg2[%c1, %c0_11, %c0_12], %17 {strides = array<i32>} : memref<2x8x256xf32, #tpu.memory_space<vmem>>, vector<1x8x256xf32>,
    return
  }
}

</mosaic_0001>

<llo_original>
// kernel: _forward_impl.1
$region0: #{_forward_impl.1}
  #allocation0 [shape = 'u32[]', space=smem, size = 0x4, offset = 0x4, fixed_abs, tag = 'smem constant byte address 0x4 - core index']
  #allocation1 [shape = 'u32[144,128]{1,0:T(1,128)}', space=vmem, size = 0x12000, scoped, tag = 'internal scratch']
  %s0 = inlined_call_operand.vmem [shape: f32[37,512], index: 0, kind: input, shape index: {}]
  %s1 = inlined_call_operand.vmem [shape: f32[24,37], index: 1, kind: input, shape index: {}]
  %s2 = inlined_call_operand.vmem [shape: f32[2,8,256], index: 2, kind: output, shape index: {}]
  %s3 = sld [smem:[#allocation0]]
  $region18: #{_forward_impl.1} parent=0
    _
  %s5 = ssub.s32 1, %s3
  %s6 = scalar_select 0, %s5, %s3
  // Predicated region
  $region2: #{_forward_impl.1} parent=0 // pred_check
    _
  $region3: #{_forward_impl.1} parent=0 // pred_check_branch
    %8 = sbr.rel (0) target = $region5
  $region4: #{_forward_impl.1} parent=0 // pred_region
    _
  $region5: #{_forward_impl.1} parent=0 // pred_fallthru
    _
  // Predicated region
  $region6: #{_forward_impl.1} parent=0 // pred_check
    _
  $region7: #{_forward_impl.1} parent=0 // pred_check_branch
    %10 = sbr.rel (0) target = $region9
  $region8: #{_forward_impl.1} parent=0 // pred_region
    _
  $region9: #{_forward_impl.1} parent=0 // pred_fallthru
    _
  %v11 = vld [vmem:[%s1] sm:$0xff]
  %v12 = vld [vmem:[%s1 + $0x8] sm:$0xff]
  %v13 = vld [vmem:[%s1 + $0x10] sm:$0xff]
  %v14 = vld [vmem:[%s0] sm:$0xff]
  %v15 = vld [vmem:[%s0 + $0x8] sm:$0xff]
  %v16 = vld [vmem:[%s0 + $0x10] sm:$0xff]
  %v17 = vld [vmem:[%s0 + $0x18] sm:$0xff]
  %v18 = vld [vmem:[%s0 + $0x20] sm:$0xff]
  %v19 = vld [vmem:[%s0 + $0x28] sm:$0xff]
  %v20 = vld [vmem:[%s0 + $0x30] sm:$0xff]
  %v21 = vld [vmem:[%s0 + $0x38] sm:$0xff]
  %v22 = vld [vmem:[%s0 + $0x40] sm:$0xff]
  %v23 = vld [vmem:[%s0 + $0x48] sm:$0xff]
  %v24 = vld [vmem:[%s0 + $0x50] sm:$0xff]
  %v25 = vld [vmem:[%s0 + $0x58] sm:$0xff]
  %v26 = vld [vmem:[%s0 + $0x60] sm:$0xff]
  %v27 = vld [vmem:[%s0 + $0x68] sm:$0xff]
  %v28 = vld [vmem:[%s0 + $0x70] sm:$0xff]
  %v29 = vld [vmem:[%s0 + $0x78] sm:$0xff]
  %v30 = vld [vmem:[%s0 + $0x80] sm:$0x1f]
  %v31 = vld [vmem:[%s0 + $0x88] sm:$0x1f]
  %v32 = vld [vmem:[%s0 + $0x90] sm:$0x1f]
  %v33 = vld [vmem:[%s0 + $0x98] sm:$0x1f]
  %vm34 = vcmask 302080
  %v36 = vsel %vm34, %v11, 0
  %v39 = vsel %vm34, %v12, 0
  %vm41 = vcmask 1044480
  %v43 = vsel %vm41, %v30, 0
  %v46 = vsel %vm41, %v31, 0
  %v49 = vsel %vm41, %v32, 0
  %v52 = vsel %vm41, %v33, 0
  %54 = vmatprep.subr.mxu0 %v15
  %55 = vmatpush1.msra.mxu0 %v14
  %56 = vmatprep.subr.mxu0 %v19
  %57 = vmatpush1.msra.mxu0 %v18
  %58 = vmatprep.subr.mxu0 %v23
  %59 = vmatpush1.msra.mxu0 %v22
  %60 = vmatprep.subr.mxu0 %v27
  %61 = vmatpush1.msra.mxu0 %v26
  %62 = vmatprep.subr.mxu0 %v46
  %63 = vmatpush1.msra.mxu0 %v43
  %64 = vmatprep.subr.mxu0 0.0
  %65 = vmatpush1.msra.mxu0 0.0
  %66 = vmatprep.subr.mxu0 0.0
  %67 = vmatpush1.msra.mxu0 0.0
  %68 = vmatprep.subr.mxu0 0.0
  %69 = vmatpush1.msra.mxu0 0.0
  %70 = vmatprep.subr.mxu0 0.0
  %71 = vmatpush1.msra.mxu0 0.0
  %72 = vmatprep.subr.mxu0 0.0
  %73 = vmatpush1.msra.mxu0 0.0
  %74 = vmatprep.subr.mxu0 0.0
  %75 = vmatpush1.msra.mxu0 0.0
  %76 = vmatprep.subr.mxu0 0.0
  %77 = vmatpush1.msra.mxu0 0.0
  %78 = vmatprep.subr.mxu0 0.0
  %79 = vmatpush1.msra.mxu0 0.0
  %80 = vmatprep.subr.mxu0 0.0
  %81 = vmatpush1.msra.mxu0 0.0
  %82 = vmatprep.subr.mxu0 0.0
  %83 = vmatpush1.msra.mxu0 0.0
  %84 = vmatprep.subr.mxu0 0.0
  %85 = vmatpush1.msra.mxu0 0.0
  %86 = vmatprep.subr.mxu0 0.0
  %87 = vmatpush1.msra.mxu0 0.0
  %88 = vmatprep.subr.mxu0 0.0
  %89 = vmatpush1.msra.mxu0 0.0
  %90 = vmatprep.subr.mxu0 0.0
  %91 = vmatpush1.msra.mxu0 0.0
  %92 = vmatprep.subr.mxu0 0.0
  %93 = vmatpush1.msra.mxu0 0.0
  %94 = vmatprep.subr.mxu0 0.0
  %95 = vmatpush1.msra.mxu0 0.0
  %96 = vmatprep.subr.mxu0 0.0
  %97 = vmatpush1.msra.mxu0 0.0
  %98 = vmatprep.subr.mxu0 0.0
  %99 = vmatpush1.msra.mxu0 0.0
  %100 = vmatprep.subr.mxu0 0.0
  %101 = vmatpush1.msra.mxu0 0.0
  %102 = vmatprep.subr.mxu0 0.0
  %103 = vmatpush1.msra.mxu0 0.0
  %104 = vmatprep.subr.mxu0 0.0
  %105 = vmatpush1.msra.mxu0 0.0
  %106 = vmatprep.subr.mxu0 0.0
  %107 = vmatpush1.msra.mxu0 0.0
  %108 = vmatprep.subr.mxu0 0.0
  %109 = vmatpush1.msra.mxu0 0.0
  %110 = vmatprep.subr.mxu0 0.0
  %111 = vmatpush1.msra.mxu0 0.0
  %112 = vmatprep.subr.mxu0 0.0
  %113 = vmatpush1.msra.mxu0 0.0
  %114 = vmatprep.subr.mxu0 0.0
  %115 = vmatpush1.msra.mxu0 0.0
  %116 = vmatprep.subr.mxu0 0.0
  %117 = vmatpush1.msra.mxu0 0.0
  %118 = vmatprep.mubr.f32.mxu0 0.0
  %119 = vmatmul.mubr.f32.gmra.mrb[0].mxu0 %v36
  %v120 = vpop.f32.mrb[0].mxu0
  %v121 = vadd.f32 0.0, %v120
  %v122 = vpop.f32.mrb[0].mxu0
  %v123 = vadd.f32 0.0, %v122
  %124 = vmatprep.mubr.f32.mxu0 0.0
  %125 = vmatmul.mubr.f32.gmra.mrb[0].mxu0 %v39
  %v126 = vpop.f32.mrb[0].mxu0
  %v127 = vadd.f32 0.0, %v126
  %v128 = vpop.f32.mrb[0].mxu0
  %v129 = vadd.f32 0.0, %v128
  %130 = vdwg.mxu0
  %131 = vmatprep.subr.mxu0 %v17
  %132 = vmatpush1.msra.mxu0 %v16
  %133 = vmatprep.subr.mxu0 %v21
  %134 = vmatpush1.msra.mxu0 %v20
  %135 = vmatprep.subr.mxu0 %v25
  %136 = vmatpush1.msra.mxu0 %v24
  %137 = vmatprep.subr.mxu0 %v29
  %138 = vmatpush1.msra.mxu0 %v28
  %139 = vmatprep.subr.mxu0 %v52
  %140 = vmatpush1.msra.mxu0 %v49
  %141 = vmatprep.subr.mxu0 0.0
  %142 = vmatpush1.msra.mxu0 0.0
  %143 = vmatprep.subr.mxu0 0.0
  %144 = vmatpush1.msra.mxu0 0.0
  %145 = vmatprep.subr.mxu0 0.0
  %146 = vmatpush1.msra.mxu0 0.0
  %147 = vmatprep.subr.mxu0 0.0
  %148 = vmatpush1.msra.mxu0 0.0
  %149 = vmatprep.subr.mxu0 0.0
  %150 = vmatpush1.msra.mxu0 0.0
  %151 = vmatprep.subr.mxu0 0.0
  %152 = vmatpush1.msra.mxu0 0.0
  %153 = vmatprep.subr.mxu0 0.0
  %154 = vmatpush1.msra.mxu0 0.0
  %155 = vmatprep.subr.mxu0 0.0
  %156 = vmatpush1.msra.mxu0 0.0
  %157 = vmatprep.subr.mxu0 0.0
  %158 = vmatpush1.msra.mxu0 0.0
  %159 = vmatprep.subr.mxu0 0.0
  %160 = vmatpush1.msra.mxu0 0.0
  %161 = vmatprep.subr.mxu0 0.0
  %162 = vmatpush1.msra.mxu0 0.0
  %163 = vmatprep.subr.mxu0 0.0
  %164 = vmatpush1.msra.mxu0 0.0
  %165 = vmatprep.subr.mxu0 0.0
  %166 = vmatpush1.msra.mxu0 0.0
  %167 = vmatprep.subr.mxu0 0.0
  %168 = vmatpush1.msra.mxu0 0.0
  %169 = vmatprep.subr.mxu0 0.0
  %170 = vmatpush1.msra.mxu0 0.0
  %171 = vmatprep.subr.mxu0 0.0
  %172 = vmatpush1.msra.mxu0 0.0
  %173 = vmatprep.subr.mxu0 0.0
  %174 = vmatpush1.msra.mxu0 0.0
  %175 = vmatprep.subr.mxu0 0.0
  %176 = vmatpush1.msra.mxu0 0.0
  %177 = vmatprep.subr.mxu0 0.0
  %178 = vmatpush1.msra.mxu0 0.0
  %179 = vmatprep.subr.mxu0 0.0
  %180 = vmatpush1.msra.mxu0 0.0
  %181 = vmatprep.subr.mxu0 0.0
  %182 = vmatpush1.msra.mxu0 0.0
  %183 = vmatprep.subr.mxu0 0.0
  %184 = vmatpush1.msra.mxu0 0.0
  %185 = vmatprep.subr.mxu0 0.0
  %186 = vmatpush1.msra.mxu0 0.0
  %187 = vmatprep.subr.mxu0 0.0
  %188 = vmatpush1.msra.mxu0 0.0
  %189 = vmatprep.subr.mxu0 0.0
  %190 = vmatpush1.msra.mxu0 0.0
  %191 = vmatprep.subr.mxu0 0.0
  %192 = vmatpush1.msra.mxu0 0.0
  %193 = vmatprep.subr.mxu0 0.0
  %194 = vmatpush1.msra.mxu0 0.0
  %195 = vmatprep.mubr.f32.mxu0 0.0
  %196 = vmatmul.mubr.f32.gmra.mrb[0].mxu0 %v36
  %v197 = vpop.f32.mrb[0].mxu0
  %v198 = vadd.f32 0.0, %v197
  %v199 = vpop.f32.mrb[0].mxu0
  %v200 = vadd.f32 0.0, %v199
  %201 = vmatprep.mubr.f32.mxu0 0.0
  %202 = vmatmul.mubr.f32.gmra.mrb[0].mxu0 %v39
  %v203 = vpop.f32.mrb[0].mxu0
  %v204 = vadd.f32 0.0, %v203
  %v205 = vpop.f32.mrb[0].mxu0
  %v206 = vadd.f32 0.0, %v205
  %207 = vdwg.mxu0
  %v208 = vmax.f32 %v121, 0.0
  %v209 = vmax.f32 %v123, 0.0
  %v210 = vmax.f32 %v198, 0.0
  %v211 = vmax.f32 %v200, 0.0
  %v212 = vmax.f32 %v127, 0.0
  %v213 = vmax.f32 %v129, 0.0
  %v214 = vmax.f32 %v204, 0.0
  %v215 = vmax.f32 %v206, 0.0
  %217 = vset.pattern.permute.xlu0 16
  %218 = vperm.xlu0 %217, %v13
  %v219 = vpop.permute.xlu0 %218
  %vm221 = vcmask 130048
  %v222 = vsel %vm221, %v13, 0
  %224 = vmatprep.subr.mxu0 %v209
  %225 = vmatpush1.msra.mxu0 %v208
  %226 = vmatprep.subr.mxu0 %v213
  %227 = vmatpush1.msra.mxu0 %v212
  %228 = vmatprep.subr.mxu0 0.0
  %229 = vmatpush1.msra.mxu0 0.0
  %230 = vmatprep.subr.mxu0 0.0
  %231 = vmatpush1.msra.mxu0 0.0
  %232 = vmatprep.subr.mxu0 0.0
  %233 = vmatpush1.msra.mxu0 0.0
  %234 = vmatprep.subr.mxu0 0.0
  %235 = vmatpush1.msra.mxu0 0.0
  %236 = vmatprep.subr.mxu0 0.0
  %237 = vmatpush1.msra.mxu0 0.0
  %238 = vmatprep.subr.mxu0 0.0
  %239 = vmatpush1.msra.mxu0 0.0
  %240 = vmatprep.subr.mxu0 0.0
  %241 = vmatpush1.msra.mxu0 0.0
  %242 = vmatprep.subr.mxu0 0.0
  %243 = vmatpush1.msra.mxu0 0.0
  %244 = vmatprep.subr.mxu0 0.0
  %245 = vmatpush1.msra.mxu0 0.0
  %246 = vmatprep.subr.mxu0 0.0
  %247 = vmatpush1.msra.mxu0 0.0
  %248 = vmatprep.subr.mxu0 0.0
  %249 = vmatpush1.msra.mxu0 0.0
  %250 = vmatprep.subr.mxu0 0.0
  %251 = vmatpush1.msra.mxu0 0.0
  %252 = vmatprep.subr.mxu0 0.0
  %253 = vmatpush1.msra.mxu0 0.0
  %254 = vmatprep.subr.mxu0 0.0
  %255 = vmatpush1.msra.mxu0 0.0
  %256 = vmatprep.subr.mxu0 0.0
  %257 = vmatpush1.msra.mxu0 0.0
  %258 = vmatprep.subr.mxu0 0.0
  %259 = vmatpush1.msra.mxu0 0.0
  %260 = vmatprep.subr.mxu0 0.0
  %261 = vmatpush1.msra.mxu0 0.0
  %262 = vmatprep.subr.mxu0 0.0
  %263 = vmatpush1.msra.mxu0 0.0
  %264 = vmatprep.subr.mxu0 0.0
  %265 = vmatpush1.msra.mxu0 0.0
  %266 = vmatprep.subr.mxu0 0.0
  %267 = vmatpush1.msra.mxu0 0.0
  %268 = vmatprep.subr.mxu0 0.0
  %269 = vmatpush1.msra.mxu0 0.0
  %270 = vmatprep.subr.mxu0 0.0
  %271 = vmatpush1.msra.mxu0 0.0
  %272 = vmatprep.subr.mxu0 0.0
  %273 = vmatpush1.msra.mxu0 0.0
  %274 = vmatprep.subr.mxu0 0.0
  %275 = vmatpush1.msra.mxu0 0.0
  %276 = vmatprep.subr.mxu0 0.0
  %277 = vmatpush1.msra.mxu0 0.0
  %278 = vmatprep.subr.mxu0 0.0
  %279 = vmatpush1.msra.mxu0 0.0
  %280 = vmatprep.subr.mxu0 0.0
  %281 = vmatpush1.msra.mxu0 0.0
  %282 = vmatprep.subr.mxu0 0.0
  %283 = vmatpush1.msra.mxu0 0.0
  %284 = vmatprep.subr.mxu0 0.0
  %285 = vmatpush1.msra.mxu0 0.0
  %286 = vmatprep.subr.mxu0 0.0
  %287 = vmatpush1.msra.mxu0 0.0
  %288 = vmatprep.mubr.f32.mxu0 0.0
  %289 = vmatmul.mubr.f32.gmra.mrb[0].mxu0 %v222
  %v290 = vpop.f32.mrb[0].mxu0
  %v291 = vadd.f32 %v219, %v290
  %v292 = vpop.f32.mrb[0].mxu0
  %v293 = vadd.f32 %v219, %v292
  %294 = vdwg.mxu0
  %295 = vmatprep.subr.mxu0 %v211
  %296 = vmatpush1.msra.mxu0 %v210
  %297 = vmatprep.subr.mxu0 %v215
  %298 = vmatpush1.msra.mxu0 %v214
  %299 = vmatprep.subr.mxu0 0.0
  %300 = vmatpush1.msra.mxu0 0.0
  %301 = vmatprep.subr.mxu0 0.0
  %302 = vmatpush1.msra.mxu0 0.0
  %303 = vmatprep.subr.mxu0 0.0
  %304 = vmatpush1.msra.mxu0 0.0
  %305 = vmatprep.subr.mxu0 0.0
  %306 = vmatpush1.msra.mxu0 0.0
  %307 = vmatprep.subr.mxu0 0.0
  %308 = vmatpush1.msra.mxu0 0.0
  %309 = vmatprep.subr.mxu0 0.0
  %310 = vmatpush1.msra.mxu0 0.0
  %311 = vmatprep.subr.mxu0 0.0
  %312 = vmatpush1.msra.mxu0 0.0
  %313 = vmatprep.subr.mxu0 0.0
  %314 = vmatpush1.msra.mxu0 0.0
  %315 = vmatprep.subr.mxu0 0.0
  %316 = vmatpush1.msra.mxu0 0.0
  %317 = vmatprep.subr.mxu0 0.0
  %318 = vmatpush1.msra.mxu0 0.0
  %319 = vmatprep.subr.mxu0 0.0
  %320 = vmatpush1.msra.mxu0 0.0
  %321 = vmatprep.subr.mxu0 0.0
  %322 = vmatpush1.msra.mxu0 0.0
  %323 = vmatprep.subr.mxu0 0.0
  %324 = vmatpush1.msra.mxu0 0.0
  %325 = vmatprep.subr.mxu0 0.0
  %326 = vmatpush1.msra.mxu0 0.0
  %327 = vmatprep.subr.mxu0 0.0
  %328 = vmatpush1.msra.mxu0 0.0
  %329 = vmatprep.subr.mxu0 0.0
  %330 = vmatpush1.msra.mxu0 0.0
  %331 = vmatprep.subr.mxu0 0.0
  %332 = vmatpush1.msra.mxu0 0.0
  %333 = vmatprep.subr.mxu0 0.0
  %334 = vmatpush1.msra.mxu0 0.0
  %335 = vmatprep.subr.mxu0 0.0
  %336 = vmatpush1.msra.mxu0 0.0
  %337 = vmatprep.subr.mxu0 0.0
  %338 = vmatpush1.msra.mxu0 0.0
  %339 = vmatprep.subr.mxu0 0.0
  %340 = vmatpush1.msra.mxu0 0.0
  %341 = vmatprep.subr.mxu0 0.0
  %342 = vmatpush1.msra.mxu0 0.0
  %343 = vmatprep.subr.mxu0 0.0
  %344 = vmatpush1.msra.mxu0 0.0
  %345 = vmatprep.subr.mxu0 0.0
  %346 = vmatpush1.msra.mxu0 0.0
  %347 = vmatprep.subr.mxu0 0.0
  %348 = vmatpush1.msra.mxu0 0.0
  %349 = vmatprep.subr.mxu0 0.0
  %350 = vmatpush1.msra.mxu0 0.0
  %351 = vmatprep.subr.mxu0 0.0
  %352 = vmatpush1.msra.mxu0 0.0
  %353 = vmatprep.subr.mxu0 0.0
  %354 = vmatpush1.msra.mxu0 0.0
  %355 = vmatprep.subr.mxu0 0.0
  %356 = vmatpush1.msra.mxu0 0.0
  %357 = vmatprep.subr.mxu0 0.0
  %358 = vmatpush1.msra.mxu0 0.0
  %359 = vmatprep.mubr.f32.mxu0 0.0
  %360 = vmatmul.mubr.f32.gmra.mrb[0].mxu0 %v222
  %v361 = vpop.f32.mrb[0].mxu0
  %v362 = vadd.f32 %v219, %v361
  %v363 = vpop.f32.mrb[0].mxu0
  %v364 = vadd.f32 %v219, %v363
  %365 = vdwg.mxu0
  %366 = vst [vmem:[%s2] sm:$0xff] %v291
  %367 = vst [vmem:[%s2 + $0x8] sm:$0xff] %v293
  %s368 = scalar_lea.vmem %s2, 16
  %369 = vst [vmem:[%s368] sm:$0xff] %v362
  %370 = vst [vmem:[%s368 + $0x8] sm:$0xff] %v364
  // Predicated region
  $region10: #{_forward_impl.1} parent=0 // pred_check
    _
  $region11: #{_forward_impl.1} parent=0 // pred_check_branch
    %372 = sbr.rel (0) target = $region13
  $region12: #{_forward_impl.1} parent=0 // pred_region
    _
  $region13: #{_forward_impl.1} parent=0 // pred_fallthru
    _
  // Predicated region
  $region14: #{_forward_impl.1} parent=0 // pred_check
    _
  $region15: #{_forward_impl.1} parent=0 // pred_check_branch
    %374 = sbr.rel (0) target = $region17
  $region16: #{_forward_impl.1} parent=0 // pred_region
    _
  $region17: #{_forward_impl.1} parent=0 // pred_fallthru
    _

</llo_original>
